<compile_context>
chip_gen: v7x
topology: tpu7x:2x2x1
jax: 0.10.0
libtpu: 0.0.40
codegen_flags: <defaults>
</compile_context>

<pallas_src>
import functools

import jax
import jax.numpy as jnp
from jax.experimental import pallas as pl
from jax.experimental.pallas import tpu as pltpu

_LANE = 128     # lane width: last dim of every block padded to this
_SUBLANE = 8    # sublane width: batch padded to this


def _round_up(n: int, m: int) -> int:
    return ((n + m - 1) // m) * m


def _mlp_fused_kernel(*refs, n_layers: int):
    """refs = (x_ref, w0_ref, b0_ref, ..., w_{L-1}_ref, b_{L-1}_ref, o_ref)."""
    x_ref = refs[0]
    o_ref = refs[-1]
    p_refs = refs[1:-1]

    h = x_ref[...]                                        # [tm, D0_pad]
    for i in range(n_layers):
        w_ref = p_refs[2 * i]                             # [D_i_pad, D_{i+1}_pad]
        b_ref = p_refs[2 * i + 1]                         # [1,       D_{i+1}_pad]
        # Bias folded into the accumulator init; MXU matmul accumulates in f32.
        acc = b_ref[...] + jnp.dot(h, w_ref[...],
                                   preferred_element_type=jnp.float32)
        if i < n_layers - 1:
            acc = jnp.tanh(acc)                           # EUP transcendental, f32
        h = acc
    o_ref[...] = h.astype(o_ref.dtype)


def mlp_forward_pallas(x, params):
    """y = MLP(x) with all layers fused into one Pallas kernel.

    x:      [B, D0]
    params: list of (w, b) with w: [D_in, D_out], b: [D_out]
    """
    n_layers = len(params)
    B, D0 = x.shape
    dims = [D0] + [w.shape[1] for (w, _) in params]
    dims_pad = [_round_up(d, _LANE) for d in dims]

    # Batch padding / tiling: tile the batch so large batches pipeline and
    # (on v7x) shard across both TensorCores.
    B8 = _round_up(B, _SUBLANE)
    tm = min(B8, 256)
    B_pad = _round_up(B8, tm)

    # Zero-pad input to lane-dense shape.
    x_pad = jnp.zeros((B_pad, dims_pad[0]), x.dtype).at[:B, :D0].set(x)

    flat_inputs = [x_pad]
    in_specs = [pl.BlockSpec((tm, dims_pad[0]), lambda i: (i, 0))]

    for li, (w, b) in enumerate(params):
        d_in, d_out = dims[li], dims[li + 1]
        d_in_p, d_out_p = dims_pad[li], dims_pad[li + 1]
        w_pad = jnp.zeros((d_in_p, d_out_p), w.dtype).at[:d_in, :d_out].set(w)
        b_pad = jnp.zeros((1, d_out_p), b.dtype).at[0, :d_out].set(b)
        flat_inputs.append(w_pad)
        flat_inputs.append(b_pad)
        # Weights/biases: full-extent blocks, constant index -> stay resident
        # in VMEM across the batch grid.
        in_specs.append(pl.BlockSpec((d_in_p, d_out_p), lambda i: (0, 0)))
        in_specs.append(pl.BlockSpec((1, d_out_p), lambda i: (0, 0)))

    out_spec = pl.BlockSpec((tm, dims_pad[-1]), lambda i: (i, 0))
    kernel = functools.partial(_mlp_fused_kernel, n_layers=n_layers)

    out_pad = pl.pallas_call(
        kernel,
        out_shape=jax.ShapeDtypeStruct((B_pad, dims_pad[-1]), x.dtype),
        grid=(B_pad // tm,),
        in_specs=in_specs,
        out_specs=out_spec,
        compiler_params=pltpu.CompilerParams(
            # Batch axis is independent -> shard across v7x's 2 TensorCores
            # (no-op on v5e/v6e which have a single TC).
            dimension_semantics=("parallel",),
        ),
    )(*flat_inputs)

    # Strip batch / feature padding.
    return out_pad[:B, :dims[-1]]


def init_mlp_params(sizes, key, dtype=jnp.float32):
    """Deterministic init mimicking nn.Linear defaults (uniform(+-1/sqrt(fan_in)))."""
    params = []
    for i in range(len(sizes) - 1):
        fan_in, fan_out = sizes[i], sizes[i + 1]
        key, kw, kb = jax.random.split(key, 3)
        bound = 1.0 / jnp.sqrt(jnp.asarray(fan_in, dtype))
        # stored as [D_in, D_out] (transpose of torch's [out, in])
        w = jax.random.uniform(kw, (fan_in, fan_out), dtype, -bound, bound)
        b = jax.random.uniform(kb, (fan_out,), dtype, -bound, bound)
        params.append((w, b))
    return params


def mlp_reference(x, params):
    """Pure-JAX reference for correctness checking."""
    n_layers = len(params)
    for i, (w, b) in enumerate(params):
        x = x @ w + b
        if i < n_layers - 1:
            x = jnp.tanh(x)
    return x


if __name__ == "__main__":
    # Small shapes consistent with the module: MLP(sizes=(32, 64, 16)), batch=8.
    sizes = (32, 64, 16)
    batch = 8

    key = jax.random.PRNGKey(0)
    key, kx = jax.random.split(key)
    x = jax.random.normal(kx, (batch, sizes[0]), jnp.float32)
    params = init_mlp_params(sizes, key)

    fwd = jax.jit(mlp_forward_pallas)
    out = jax.block_until_ready(fwd(x, params))

    ref = mlp_reference(x, params)
    assert out.shape == (batch, sizes[-1])
    assert jnp.allclose(out, ref, atol=1e-5, rtol=1e-5), "Pallas MLP mismatch vs reference"

    print("KERNEL_OK")
</pallas_src>

<mosaic_0001>
module attributes {stable_mosaic.version = 11 : i64} {
  func.func @_mlp_fused_kernel(%arg0: i32, %arg1: memref<8x128xf32, #tpu.memory_space<vmem>>, %arg2: memref<128x128xf32, #tpu.memory_space<vmem>>, %arg3: memref<1x128xf32, #tpu.memory_space<vmem>>, %arg4: memref<128x128xf32, #tpu.memory_space<vmem>>, %arg5: memref<1x128xf32, #tpu.memory_space<vmem>>, %arg6: memref<8x128xf32, #tpu.memory_space<vmem>>) attributes {dimension_semantics = [#tpu.dimension_semantics<parallel>], iteration_bounds = array<i64: 1>, scalar_prefetch = 0 : i64, scratch_operands = 0 : i64, tpu.core_type = #tpu.core_type<tc>, window_params = [{transform_indices = @transform_0, window_bounds = array<i64: 8, 128>}, {pipeline_mode = #tpu.pipeline_mode<synchronous>, transform_indices = @transform_1, window_bounds = array<i64: 128, 128>}, {pipeline_mode = #tpu.pipeline_mode<synchronous>, transform_indices = @transform_2, window_bounds = array<i64: 1, 128>}, {pipeline_mode = #tpu.pipeline_mode<synchronous>, transform_indices = @transform_3, window_bounds = array<i64: 128, 128>}, {pipeline_mode = #tpu.pipeline_mode<synchronous>, transform_indices = @transform_4, window_bounds = array<i64: 1, 128>}, {transform_indices = @transform_5, window_bounds = array<i64: 8, 128>}]} {
    %c0 = arith.constant 0 : index
    %c0_0 = arith.constant 0 : index
    %0 = vector.load %arg1[%c0, %c0_0] : memref<8x128xf32, #tpu.memory_space<vmem>>, vector<8x128xf32>
    %c0_1 = arith.constant 0 : index
    %c0_2 = arith.constant 0 : index
    %1 = vector.load %arg3[%c0_1, %c0_2] : memref<1x128xf32, #tpu.memory_space<vmem>>, vector<1x128xf32>
    %c0_3 = arith.constant 0 : index
    %c0_4 = arith.constant 0 : index
    %2 = vector.load %arg2[%c0_3, %c0_4] : memref<128x128xf32, #tpu.memory_space<vmem>>, vector<128x128xf32>
    %cst = arith.constant dense<0.000000e+00> : vector<8x128xf32>
    %3 = tpu.matmul %0, %2, %cst {dimension_numbers = #tpu.dot_dimension_numbers<[1], [0], [0], [1], [0, 0, 1, 1], [], []>} : vector<8x128xf32>, vector<128x128xf32>, vector<8x128xf32> -> vector<8x128xf32>
    %4 = vector.broadcast %1 : vector<1x128xf32> to vector<8x128xf32>
    %5 = arith.addf %4, %3 : vector<8x128xf32>
    %6 = math.tanh %5 : vector<8x128xf32>
    %c0_5 = arith.constant 0 : index
    %c0_6 = arith.constant 0 : index
    %7 = vector.load %arg5[%c0_5, %c0_6] : memref<1x128xf32, #tpu.memory_space<vmem>>, vector<1x128xf32>
    %c0_7 = arith.constant 0 : index
    %c0_8 = arith.constant 0 : index
    %8 = vector.load %arg4[%c0_7, %c0_8] : memref<128x128xf32, #tpu.memory_space<vmem>>, vector<128x128xf32>
    %cst_9 = arith.constant dense<0.000000e+00> : vector<8x128xf32>
    %9 = tpu.matmul %6, %8, %cst_9 {dimension_numbers = #tpu.dot_dimension_numbers<[1], [0], [0], [1], [0, 0, 1, 1], [], []>} : vector<8x128xf32>, vector<128x128xf32>, vector<8x128xf32> -> vector<8x128xf32>
    %10 = vector.broadcast %7 : vector<1x128xf32> to vector<8x128xf32>
    %11 = arith.addf %10, %9 : vector<8x128xf32>
    %c0_10 = arith.constant 0 : index
    %c0_11 = arith.constant 0 : index
    %12 = vector.load %arg6[%c0_10, %c0_11] : memref<8x128xf32, #tpu.memory_space<vmem>>, vector<8x128xf32>
    tpu.vector_store %arg6[%c0_10, %c0_11], %11 {strides = array<i32>} : memref<8x128xf32, #tpu.memory_space<vmem>>, vector<8x128xf32>,
    return
  }
  func.func @transform_0(%arg0: i32) -> (i32, i32) {
    %c0_i32 = arith.constant 0 : i32
    %c0_i32_0 = arith.constant 0 : i32
    return %arg0, %c0_i32 : i32, i32
  }
  func.func @transform_1(%arg0: i32) -> (i32, i32) {
    %c0_i32 = arith.constant 0 : i32
    %c0_i32_0 = arith.constant 0 : i32
    %c0_i32_1 = arith.constant 0 : i32
    return %c0_i32, %c0_i32_0 : i32, i32
  }
  func.func @transform_2(%arg0: i32) -> (i32, i32) {
    %c0_i32 = arith.constant 0 : i32
    %c0_i32_0 = arith.constant 0 : i32
    %c0_i32_1 = arith.constant 0 : i32
    return %c0_i32, %c0_i32_0 : i32, i32
  }
  func.func @transform_3(%arg0: i32) -> (i32, i32) {
    %c0_i32 = arith.constant 0 : i32
    %c0_i32_0 = arith.constant 0 : i32
    %c0_i32_1 = arith.constant 0 : i32
    return %c0_i32, %c0_i32_0 : i32, i32
  }
  func.func @transform_4(%arg0: i32) -> (i32, i32) {
    %c0_i32 = arith.constant 0 : i32
    %c0_i32_0 = arith.constant 0 : i32
    %c0_i32_1 = arith.constant 0 : i32
    return %c0_i32, %c0_i32_0 : i32, i32
  }
  func.func @transform_5(%arg0: i32) -> (i32, i32) {
    %c0_i32 = arith.constant 0 : i32
    %c0_i32_0 = arith.constant 0 : i32
    return %arg0, %c0_i32 : i32, i32
  }
}

</mosaic_0001>

<llo_original>
// kernel: mlp_forward_pallas.1
$region0: #{mlp_forward_pallas.1}
  #allocation0 [shape = 'u32[]', space=smem, size = 0x4, offset = 0x4, fixed_abs, tag = 'smem constant byte address 0x4 - core index']
  #allocation1 [shape = 'u32[144,128]{1,0:T(1,128)}', space=vmem, size = 0x12000, scoped, tag = 'internal scratch']
  %s0 = inlined_call_operand.vmem [shape: f32[8,128], index: 0, kind: input, shape index: {}]
  %s1 = inlined_call_operand.vmem [shape: f32[128,128], index: 1, kind: input, shape index: {}]
  %s2 = inlined_call_operand.vmem [shape: f32[1,128], index: 2, kind: input, shape index: {}]
  %s3 = inlined_call_operand.vmem [shape: f32[128,128], index: 3, kind: input, shape index: {}]
  %s4 = inlined_call_operand.vmem [shape: f32[1,128], index: 4, kind: input, shape index: {}]
  %s5 = inlined_call_operand.hbm [shape: f32[8,128], index: 5, kind: output, shape index: {}]
  %s6 = sld [smem:[#allocation0]]
  $region30: #{mlp_forward_pallas.1} parent=0
    _
  %s8 = ssub.s32 1, %s6
  %s9 = scalar_select 0, %s8, %s6
  $region1: #{mlp_forward_pallas.1} parent=0
    #allocation2 [shape = 'u8[4096]{0}', space=vmem, size = 0x1000, scoped, tag = 'output window, operand 0, single buffered']
    #allocation3 [shape = 's32[1]{0}', space=sflag, size = 0x4, scoped, tag = 'scoped memory for mlp_forward_pallas.1']
    %10 = vsyncpa [#allocation3], 0
    // Predicated region
    $region2: #{mlp_forward_pallas.1} parent=1 // pred_check
      _
    $region3: #{mlp_forward_pallas.1} parent=1 // pred_check_branch
      %12 = sbr.rel (0) target = $region5
    $region4: #{mlp_forward_pallas.1} parent=1 // pred_region
      _
    $region5: #{mlp_forward_pallas.1} parent=1 // pred_fallthru
      _
    // Predicated region
    $region6: #{mlp_forward_pallas.1} parent=1 // pred_check
      _
    $region7: #{mlp_forward_pallas.1} parent=1 // pred_check_branch
      %14 = sbr.rel (0) target = $region9
    $region8: #{mlp_forward_pallas.1} parent=1 // pred_region
      _
    $region9: #{mlp_forward_pallas.1} parent=1 // pred_fallthru
      _
    // Predicated region
    $region10: #{mlp_forward_pallas.1} parent=1 // pred_check
      _
    $region11: #{mlp_forward_pallas.1} parent=1 // pred_check_branch
      %16 = sbr.rel (0) target = $region13
    $region12: #{mlp_forward_pallas.1} parent=1 // pred_region
      _
    $region13: #{mlp_forward_pallas.1} parent=1 // pred_fallthru
      _
    // Predicated region
    $region14: #{mlp_forward_pallas.1} parent=1 // pred_check
      _
    $region15: #{mlp_forward_pallas.1} parent=1 // pred_check_branch
      %18 = sbr.rel (0) target = $region17
    $region16: #{mlp_forward_pallas.1} parent=1 // pred_region
      _
    $region17: #{mlp_forward_pallas.1} parent=1 // pred_fallthru
      _
    // Predicated region
    $region18: #{mlp_forward_pallas.1} parent=1 // pred_check
      _
    $region19: #{mlp_forward_pallas.1} parent=1 // pred_check_branch
      %20 = sbr.rel (0) target = $region21
    $region20: #{mlp_forward_pallas.1} parent=1 // pred_region
      _
    $region21: #{mlp_forward_pallas.1} parent=1 // pred_fallthru
      _
    %v21 = vld [vmem:[%s0] sm:$0xff]
    %v22 = vld [vmem:[%s2] sm:$0x1]
    %v23 = vld [vmem:[%s1] sm:$0xff]
    %v24 = vld [vmem:[%s1 + $0x8] sm:$0xff]
    %v25 = vld [vmem:[%s1 + $0x10] sm:$0xff]
    %v26 = vld [vmem:[%s1 + $0x18] sm:$0xff]
    %v27 = vld [vmem:[%s1 + $0x20] sm:$0xff]
    %v28 = vld [vmem:[%s1 + $0x28] sm:$0xff]
    %v29 = vld [vmem:[%s1 + $0x30] sm:$0xff]
    %v30 = vld [vmem:[%s1 + $0x38] sm:$0xff]
    %v31 = vld [vmem:[%s1 + $0x40] sm:$0xff]
    %v32 = vld [vmem:[%s1 + $0x48] sm:$0xff]
    %v33 = vld [vmem:[%s1 + $0x50] sm:$0xff]
    %v34 = vld [vmem:[%s1 + $0x58] sm:$0xff]
    %v35 = vld [vmem:[%s1 + $0x60] sm:$0xff]
    %v36 = vld [vmem:[%s1 + $0x68] sm:$0xff]
    %v37 = vld [vmem:[%s1 + $0x70] sm:$0xff]
    %v38 = vld [vmem:[%s1 + $0x78] sm:$0xff]
    %39 = vmatprep.subr.mxu0 0.0
    %40 = vmatpush1.msra.mxu0 %v23
    %41 = vmatprep.subr.mxu0 0.0
    %42 = vmatpush1.msra.mxu0 %v24
    %43 = vmatprep.subr.mxu0 0.0
    %44 = vmatpush1.msra.mxu0 %v25
    %45 = vmatprep.subr.mxu0 0.0
    %46 = vmatpush1.msra.mxu0 %v26
    %47 = vmatprep.subr.mxu0 0.0
    %48 = vmatpush1.msra.mxu0 %v27
    %49 = vmatprep.subr.mxu0 0.0
    %50 = vmatpush1.msra.mxu0 %v28
    %51 = vmatprep.subr.mxu0 0.0
    %52 = vmatpush1.msra.mxu0 %v29
    %53 = vmatprep.subr.mxu0 0.0
    %54 = vmatpush1.msra.mxu0 %v30
    %55 = vmatprep.subr.mxu0 0.0
    %56 = vmatpush1.msra.mxu0 %v31
    %57 = vmatprep.subr.mxu0 0.0
    %58 = vmatpush1.msra.mxu0 %v32
    %59 = vmatprep.subr.mxu0 0.0
    %60 = vmatpush1.msra.mxu0 %v33
    %61 = vmatprep.subr.mxu0 0.0
    %62 = vmatpush1.msra.mxu0 %v34
    %63 = vmatprep.subr.mxu0 0.0
    %64 = vmatpush1.msra.mxu0 %v35
    %65 = vmatprep.subr.mxu0 0.0
    %66 = vmatpush1.msra.mxu0 %v36
    %67 = vmatprep.subr.mxu0 0.0
    %68 = vmatpush1.msra.mxu0 %v37
    %69 = vmatprep.subr.mxu0 0.0
    %70 = vmatpush1.msra.mxu0 %v38
    %71 = vmatprep.subr.mxu0 0.0
    %72 = vmatpush1.msra.mxu0 0.0
    %73 = vmatprep.subr.mxu0 0.0
    %74 = vmatpush1.msra.mxu0 0.0
    %75 = vmatprep.subr.mxu0 0.0
    %76 = vmatpush1.msra.mxu0 0.0
    %77 = vmatprep.subr.mxu0 0.0
    %78 = vmatpush1.msra.mxu0 0.0
    %79 = vmatprep.subr.mxu0 0.0
    %80 = vmatpush1.msra.mxu0 0.0
    %81 = vmatprep.subr.mxu0 0.0
    %82 = vmatpush1.msra.mxu0 0.0
    %83 = vmatprep.subr.mxu0 0.0
    %84 = vmatpush1.msra.mxu0 0.0
    %85 = vmatprep.subr.mxu0 0.0
    %86 = vmatpush1.msra.mxu0 0.0
    %87 = vmatprep.subr.mxu0 0.0
    %88 = vmatpush1.msra.mxu0 0.0
    %89 = vmatprep.subr.mxu0 0.0
    %90 = vmatpush1.msra.mxu0 0.0
    %91 = vmatprep.subr.mxu0 0.0
    %92 = vmatpush1.msra.mxu0 0.0
    %93 = vmatprep.subr.mxu0 0.0
    %94 = vmatpush1.msra.mxu0 0.0
    %95 = vmatprep.subr.mxu0 0.0
    %96 = vmatpush1.msra.mxu0 0.0
    %97 = vmatprep.subr.mxu0 0.0
    %98 = vmatpush1.msra.mxu0 0.0
    %99 = vmatprep.subr.mxu0 0.0
    %100 = vmatpush1.msra.mxu0 0.0
    %101 = vmatprep.subr.mxu0 0.0
    %102 = vmatpush1.msra.mxu0 0.0
    %103 = vmatprep.mubr.f32.mxu0 0.0
    %104 = vmatmul.mubr.f32.gmra.mrb[0].mxu0 %v21
    %v105 = vpop.f32.mrb[0].mxu0
    %v106 = vadd.f32 0.0, %v105
    %v107 = vpop.f32.mrb[0].mxu0
    %108 = vdwg.mxu0
    %v110 = vlaneseq
    %v111 = vshrl.u32 %v110, 7
    %v112 = vsub.s32 0, %v111
    %v113 = vrot.slane %v22, %v112
    %v115 = vadd.f32 %v113, %v106
    %v116 = vtanh.pop %v115
    %v117 = vld [vmem:[%s4] sm:$0x1]
    %v118 = vld [vmem:[%s3] sm:$0xff]
    %v119 = vld [vmem:[%s3 + $0x8] sm:$0xff]
    %v120 = vld [vmem:[%s3 + $0x10] sm:$0xff]
    %v121 = vld [vmem:[%s3 + $0x18] sm:$0xff]
    %v122 = vld [vmem:[%s3 + $0x20] sm:$0xff]
    %v123 = vld [vmem:[%s3 + $0x28] sm:$0xff]
    %v124 = vld [vmem:[%s3 + $0x30] sm:$0xff]
    %v125 = vld [vmem:[%s3 + $0x38] sm:$0xff]
    %v126 = vld [vmem:[%s3 + $0x40] sm:$0xff]
    %v127 = vld [vmem:[%s3 + $0x48] sm:$0xff]
    %v128 = vld [vmem:[%s3 + $0x50] sm:$0xff]
    %v129 = vld [vmem:[%s3 + $0x58] sm:$0xff]
    %v130 = vld [vmem:[%s3 + $0x60] sm:$0xff]
    %v131 = vld [vmem:[%s3 + $0x68] sm:$0xff]
    %v132 = vld [vmem:[%s3 + $0x70] sm:$0xff]
    %v133 = vld [vmem:[%s3 + $0x78] sm:$0xff]
    %134 = vmatprep.subr.mxu0 0.0
    %135 = vmatpush1.msra.mxu0 %v118
    %136 = vmatprep.subr.mxu0 0.0
    %137 = vmatpush1.msra.mxu0 %v119
    %138 = vmatprep.subr.mxu0 0.0
    %139 = vmatpush1.msra.mxu0 %v120
    %140 = vmatprep.subr.mxu0 0.0
    %141 = vmatpush1.msra.mxu0 %v121
    %142 = vmatprep.subr.mxu0 0.0
    %143 = vmatpush1.msra.mxu0 %v122
    %144 = vmatprep.subr.mxu0 0.0
    %145 = vmatpush1.msra.mxu0 %v123
    %146 = vmatprep.subr.mxu0 0.0
    %147 = vmatpush1.msra.mxu0 %v124
    %148 = vmatprep.subr.mxu0 0.0
    %149 = vmatpush1.msra.mxu0 %v125
    %150 = vmatprep.subr.mxu0 0.0
    %151 = vmatpush1.msra.mxu0 %v126
    %152 = vmatprep.subr.mxu0 0.0
    %153 = vmatpush1.msra.mxu0 %v127
    %154 = vmatprep.subr.mxu0 0.0
    %155 = vmatpush1.msra.mxu0 %v128
    %156 = vmatprep.subr.mxu0 0.0
    %157 = vmatpush1.msra.mxu0 %v129
    %158 = vmatprep.subr.mxu0 0.0
    %159 = vmatpush1.msra.mxu0 %v130
    %160 = vmatprep.subr.mxu0 0.0
    %161 = vmatpush1.msra.mxu0 %v131
    %162 = vmatprep.subr.mxu0 0.0
    %163 = vmatpush1.msra.mxu0 %v132
    %164 = vmatprep.subr.mxu0 0.0
    %165 = vmatpush1.msra.mxu0 %v133
    %166 = vmatprep.subr.mxu0 0.0
    %167 = vmatpush1.msra.mxu0 0.0
    %168 = vmatprep.subr.mxu0 0.0
    %169 = vmatpush1.msra.mxu0 0.0
    %170 = vmatprep.subr.mxu0 0.0
    %171 = vmatpush1.msra.mxu0 0.0
    %172 = vmatprep.subr.mxu0 0.0
    %173 = vmatpush1.msra.mxu0 0.0
    %174 = vmatprep.subr.mxu0 0.0
    %175 = vmatpush1.msra.mxu0 0.0
    %176 = vmatprep.subr.mxu0 0.0
    %177 = vmatpush1.msra.mxu0 0.0
    %178 = vmatprep.subr.mxu0 0.0
    %179 = vmatpush1.msra.mxu0 0.0
    %180 = vmatprep.subr.mxu0 0.0
    %181 = vmatpush1.msra.mxu0 0.0
    %182 = vmatprep.subr.mxu0 0.0
    %183 = vmatpush1.msra.mxu0 0.0
    %184 = vmatprep.subr.mxu0 0.0
    %185 = vmatpush1.msra.mxu0 0.0
    %186 = vmatprep.subr.mxu0 0.0
    %187 = vmatpush1.msra.mxu0 0.0
    %188 = vmatprep.subr.mxu0 0.0
    %189 = vmatpush1.msra.mxu0 0.0
    %190 = vmatprep.subr.mxu0 0.0
    %191 = vmatpush1.msra.mxu0 0.0
    %192 = vmatprep.subr.mxu0 0.0
    %193 = vmatpush1.msra.mxu0 0.0
    %194 = vmatprep.subr.mxu0 0.0
    %195 = vmatpush1.msra.mxu0 0.0
    %196 = vmatprep.subr.mxu0 0.0
    %197 = vmatpush1.msra.mxu0 0.0
    %198 = vmatprep.mubr.f32.mxu0 0.0
    %199 = vmatmul.mubr.f32.gmra.mrb[0].mxu0 %v116
    %v200 = vpop.f32.mrb[0].mxu0
    %v201 = vadd.f32 0.0, %v200
    %v202 = vpop.f32.mrb[0].mxu0
    %203 = vdwg.mxu0
    %v205 = vlaneseq
    %v206 = vshrl.u32 %v205, 7
    %v207 = vsub.s32 0, %v206
    %v208 = vrot.slane %v117, %v207
    %v210 = vadd.f32 %v208, %v201
    %211 = vst [vmem:[#allocation2] sm:$0xff] %v210
    // Predicated region
    $region22: #{mlp_forward_pallas.1} parent=1 // pred_check
      _
    $region23: #{mlp_forward_pallas.1} parent=1 // pred_check_branch
      %213 = sbr.rel (0) target = $region25
    $region24: #{mlp_forward_pallas.1} parent=1 // pred_region
      %s215 = ssub.s32 128, 128
      %216 = vsyncadd [#allocation3], %s215
      %s218 = sshll.u32 [#allocation2], 4
      %s219 = int_to_ptr.vmem [resolvable:$true] %s218
      %221 = dma.vmem_to_hbm [thread:$0]  %s219, 128, %s5, [#allocation3]
    $region25: #{mlp_forward_pallas.1} parent=1 // pred_fallthru
      _
    // Predicated region
    $region26: #{mlp_forward_pallas.1} parent=1 // pred_check
      _
    $region27: #{mlp_forward_pallas.1} parent=1 // pred_check_branch
      %223 = sbr.rel (0) target = $region29
    $region28: #{mlp_forward_pallas.1} parent=1 // pred_region
      %224 = dma.done [#allocation3], 128
    $region29: #{mlp_forward_pallas.1} parent=1 // pred_fallthru
      _
    %225 = vsyncpa [#allocation3], 1

</llo_original>
